<compile_context>
chip_gen: v6e
topology: v6e:2x2x1
jax: 0.10.0
libtpu: 0.0.40
codegen_flags: <defaults>
</compile_context>

<pallas_src>
import functools

import jax
import jax.numpy as jnp
from jax import lax
from jax.experimental import pallas as pl
from jax.experimental.pallas import tpu as pltpu


def _adjust_sharpness_kernel(mask_ref, x_ref, o_ref, *, n_iters, a, b, W, HW):
    x = x_ref[...].astype(jnp.float32)          # (rows, HW): each row = one flattened plane
    # Border mask: hoisted broadcast, done once per grid step (not per pass).
    border = jnp.broadcast_to(mask_ref[...] > 0.5, x.shape)

    def one_pass(_, img):
        # Separable 3x3 box sum via lane rolls on the flattened (H*W) axis:
        # horizontal neighbours at +-1, vertical neighbours at +-W.
        # Wrap-around only corrupts per-plane border pixels, overwritten below.
        h = img + pltpu.roll(img, shift=1, axis=1) + pltpu.roll(img, shift=HW - 1, axis=1)
        box = h + pltpu.roll(h, shift=W, axis=1) + pltpu.roll(h, shift=HW - W, axis=1)
        # Folded blend: factor*img + (1-factor)*(box + 4*img)/13 == a*img + b*box.
        # Clamp only the blend branch; border pixels stay in [0, 1] untouched.
        blend = jnp.clip(a * img + b * box, 0.0, 1.0)
        return jnp.where(border, img, blend)

    img = lax.fori_loop(0, n_iters, one_pass, x,
                        unroll=True if n_iters <= 4 else 4)
    o_ref[...] = img.astype(o_ref.dtype)


def _rows_per_block(P, HW, target_bytes=2 << 20):
    """Largest multiple-of-8 divisor of P whose (rows, HW) f32 tile is <= target."""
    if P % 8 != 0:
        return P                                 # single full block (sublane rule: full dim OK)
    cap = max(8, (target_bytes // (4 * HW)) // 8 * 8)
    best = 8
    r = 8
    while r <= min(P, cap):
        if P % r == 0:
            best = r
        r += 8
    return best


def adjust_sharpness(x, n, val):
    """x: float32 NCHW image batch with values in [0, 1]."""
    N, C, H, W = x.shape
    P = N * C
    HW = H * W
    x2 = x.reshape(P, HW)                        # contiguous reshape: no data movement

    # Per-plane border mask (1.0 = border pixel), precomputed once on the host.
    r = jnp.arange(H)[:, None]
    c = jnp.arange(W)[None, :]
    border = (r == 0) | (r == H - 1) | (c == 0) | (c == W - 1)
    mask = border.astype(jnp.float32).reshape(1, HW)

    factor = float(val)
    b = (1.0 - factor) / 13.0
    a = factor + 4.0 * b

    rows = _rows_per_block(P, HW)
    grid = P // rows

    kernel = functools.partial(
        _adjust_sharpness_kernel, n_iters=int(n), a=a, b=b, W=W, HW=HW
    )
    cost = pl.CostEstimate(
        flops=int(n) * 10 * P * HW,
        transcendentals=0,
        bytes_accessed=2 * P * HW * 4 + HW * 4,
    )

    y2 = pl.pallas_call(
        kernel,
        out_shape=jax.ShapeDtypeStruct((P, HW), x.dtype),
        grid_spec=pltpu.PrefetchScalarGridSpec(
            num_scalar_prefetch=0,
            grid=(grid,),
            in_specs=[
                pl.BlockSpec((1, HW), lambda g: (0, 0)),      # constant border mask
                pl.BlockSpec((rows, HW), lambda g: (g, 0)),   # planes for this step
            ],
            out_specs=pl.BlockSpec((rows, HW), lambda g: (g, 0)),
        ),
        compiler_params=pltpu.CompilerParams(
            dimension_semantics=("parallel",),
            # ~2 MiB tiles double-buffered for input+output stay well inside this
            # on v5e/v6e (128 MiB physical) and v7x (64 MiB physical).
            vmem_limit_bytes=32 * 1024 * 1024,
        ),
        input_output_aliases={1: 0},             # output reuses the image HBM buffer
        cost_estimate=cost,
    )(mask, x2)

    return y2.reshape(N, C, H, W)


def _reference(x, n, val):
    """Pure-JAX reference (torchvision float path)."""
    factor = float(val)
    N, C, H, W = x.shape
    row = jnp.arange(H)[:, None]
    col = jnp.arange(W)[None, :]
    border = (row == 0) | (row == H - 1) | (col == 0) | (col == W - 1)
    img = x
    for _ in range(int(n)):
        p = jnp.pad(img, ((0, 0), (0, 0), (1, 1), (1, 1)))
        s = 5.0 * img
        for dr in (0, 1, 2):
            for dc in (0, 1, 2):
                if dr == 1 and dc == 1:
                    continue
                s = s + p[:, :, dr:dr + H, dc:dc + W]
        degenerate = jnp.where(border, img, s / 13.0)
        img = jnp.clip(factor * img + (1.0 - factor) * degenerate, 0.0, 1.0)
    return img


if __name__ == "__main__":
    key = jax.random.PRNGKey(0)
    # Small deterministic "image" batch: batch=2, channels=4, spatial=16x16.
    x = jax.random.uniform(key, (2, 4, 16, 16), dtype=jnp.float32)

    # Module parameters (deterministic, set in-script): n=3 passes, sharpness val=1.7.
    n, val = 3, 1.7
    y = adjust_sharpness(x, n=n, val=val)
    jax.block_until_ready(y)

    assert y.shape == x.shape and y.dtype == x.dtype
    assert bool(jnp.all(jnp.isfinite(y)))

    y_ref = _reference(x, n, val)
    assert float(jnp.max(jnp.abs(y - y_ref))) < 2e-5

    print("KERNEL_OK")
</pallas_src>

<mosaic_0001>
module attributes {stable_mosaic.version = 11 : i64} {
  func.func @_adjust_sharpness_kernel(%arg0: i32, %arg1: memref<1x256xf32, #tpu.memory_space<vmem>>, %arg2: memref<8x256xf32, #tpu.memory_space<vmem>>, %arg3: memref<8x256xf32, #tpu.memory_space<vmem>>) attributes {dimension_semantics = [#tpu.dimension_semantics<parallel>], iteration_bounds = array<i64: 1>, scalar_prefetch = 0 : i64, scratch_operands = 0 : i64, tpu.core_type = #tpu.core_type<tc>, window_params = [{pipeline_mode = #tpu.pipeline_mode<synchronous>, transform_indices = @transform_0, window_bounds = array<i64: 1, 256>}, {transform_indices = @transform_1, window_bounds = array<i64: 8, 256>}, {transform_indices = @transform_2, window_bounds = array<i64: 8, 256>}]} {
    %c0 = arith.constant 0 : index
    %c0_0 = arith.constant 0 : index
    %0 = vector.load %arg2[%c0, %c0_0] : memref<8x256xf32, #tpu.memory_space<vmem>>, vector<8x256xf32>
    %c0_1 = arith.constant 0 : index
    %c0_2 = arith.constant 0 : index
    %1 = vector.load %arg1[%c0_1, %c0_2] : memref<1x256xf32, #tpu.memory_space<vmem>>, vector<1x256xf32>
    %cst = arith.constant 5.000000e-01 : f32
    %2 = vector.broadcast %cst : f32 to vector<1x256xf32>
    %3 = arith.cmpf ogt, %1, %2 : vector<1x256xf32>
    %4 = vector.shape_cast %3 : vector<1x256xi1> to vector<1x256xi1>
    %5 = vector.broadcast %4 : vector<1x256xi1> to vector<8x256xi1>
    %c0_i32 = arith.constant 0 : i32
    %c1_i32 = arith.constant 1 : i32
    %6 = tpu.dynamic_rotate %0 by %c1_i32 dim 1 : vector<8x256xf32>, i32 -> vector<8x256xf32>
    %7 = arith.addf %0, %6 : vector<8x256xf32>
    %c255_i32 = arith.constant 255 : i32
    %8 = tpu.dynamic_rotate %0 by %c255_i32 dim 1 : vector<8x256xf32>, i32 -> vector<8x256xf32>
    %9 = arith.addf %7, %8 : vector<8x256xf32>
    %c16_i32 = arith.constant 16 : i32
    %10 = tpu.dynamic_rotate %9 by %c16_i32 dim 1 : vector<8x256xf32>, i32 -> vector<8x256xf32>
    %11 = arith.addf %9, %10 : vector<8x256xf32>
    %c240_i32 = arith.constant 240 : i32
    %12 = tpu.dynamic_rotate %9 by %c240_i32 dim 1 : vector<8x256xf32>, i32 -> vector<8x256xf32>
    %13 = arith.addf %11, %12 : vector<8x256xf32>
    %cst_3 = arith.constant 1.48461533 : f32
    %14 = vector.broadcast %cst_3 : f32 to vector<8x256xf32>
    %15 = arith.mulf %14, %0 : vector<8x256xf32>
    %cst_4 = arith.constant -0.0538461544 : f32
    %16 = vector.broadcast %cst_4 : f32 to vector<8x256xf32>
    %17 = arith.mulf %16, %13 : vector<8x256xf32>
    %18 = arith.addf %15, %17 : vector<8x256xf32>
    %cst_5 = arith.constant 0.000000e+00 : f32
    %cst_6 = arith.constant 1.000000e+00 : f32
    %19 = vector.broadcast %cst_5 : f32 to vector<8x256xf32>
    %20 = arith.maximumf %19, %18 : vector<8x256xf32>
    %21 = vector.broadcast %cst_6 : f32 to vector<8x256xf32>
    %22 = arith.minimumf %21, %20 : vector<8x256xf32>
    %23 = arith.select %5, %0, %22 : vector<8x256xi1>, vector<8x256xf32>
    %c1_i32_7 = arith.constant 1 : i32
    %c1_i32_8 = arith.constant 1 : i32
    %24 = tpu.dynamic_rotate %23 by %c1_i32_8 dim 1 : vector<8x256xf32>, i32 -> vector<8x256xf32>
    %25 = arith.addf %23, %24 : vector<8x256xf32>
    %c255_i32_9 = arith.constant 255 : i32
    %26 = tpu.dynamic_rotate %23 by %c255_i32_9 dim 1 : vector<8x256xf32>, i32 -> vector<8x256xf32>
    %27 = arith.addf %25, %26 : vector<8x256xf32>
    %c16_i32_10 = arith.constant 16 : i32
    %28 = tpu.dynamic_rotate %27 by %c16_i32_10 dim 1 : vector<8x256xf32>, i32 -> vector<8x256xf32>
    %29 = arith.addf %27, %28 : vector<8x256xf32>
    %c240_i32_11 = arith.constant 240 : i32
    %30 = tpu.dynamic_rotate %27 by %c240_i32_11 dim 1 : vector<8x256xf32>, i32 -> vector<8x256xf32>
    %31 = arith.addf %29, %30 : vector<8x256xf32>
    %cst_12 = arith.constant 1.48461533 : f32
    %32 = vector.broadcast %cst_12 : f32 to vector<8x256xf32>
    %33 = arith.mulf %32, %23 : vector<8x256xf32>
    %cst_13 = arith.constant -0.0538461544 : f32
    %34 = vector.broadcast %cst_13 : f32 to vector<8x256xf32>
    %35 = arith.mulf %34, %31 : vector<8x256xf32>
    %36 = arith.addf %33, %35 : vector<8x256xf32>
    %cst_14 = arith.constant 0.000000e+00 : f32
    %cst_15 = arith.constant 1.000000e+00 : f32
    %37 = vector.broadcast %cst_14 : f32 to vector<8x256xf32>
    %38 = arith.maximumf %37, %36 : vector<8x256xf32>
    %39 = vector.broadcast %cst_15 : f32 to vector<8x256xf32>
    %40 = arith.minimumf %39, %38 : vector<8x256xf32>
    %41 = arith.select %5, %23, %40 : vector<8x256xi1>, vector<8x256xf32>
    %c2_i32 = arith.constant 2 : i32
    %c1_i32_16 = arith.constant 1 : i32
    %42 = tpu.dynamic_rotate %41 by %c1_i32_16 dim 1 : vector<8x256xf32>, i32 -> vector<8x256xf32>
    %43 = arith.addf %41, %42 : vector<8x256xf32>
    %c255_i32_17 = arith.constant 255 : i32
    %44 = tpu.dynamic_rotate %41 by %c255_i32_17 dim 1 : vector<8x256xf32>, i32 -> vector<8x256xf32>
    %45 = arith.addf %43, %44 : vector<8x256xf32>
    %c16_i32_18 = arith.constant 16 : i32
    %46 = tpu.dynamic_rotate %45 by %c16_i32_18 dim 1 : vector<8x256xf32>, i32 -> vector<8x256xf32>
    %47 = arith.addf %45, %46 : vector<8x256xf32>
    %c240_i32_19 = arith.constant 240 : i32
    %48 = tpu.dynamic_rotate %45 by %c240_i32_19 dim 1 : vector<8x256xf32>, i32 -> vector<8x256xf32>
    %49 = arith.addf %47, %48 : vector<8x256xf32>
    %cst_20 = arith.constant 1.48461533 : f32
    %50 = vector.broadcast %cst_20 : f32 to vector<8x256xf32>
    %51 = arith.mulf %50, %41 : vector<8x256xf32>
    %cst_21 = arith.constant -0.0538461544 : f32
    %52 = vector.broadcast %cst_21 : f32 to vector<8x256xf32>
    %53 = arith.mulf %52, %49 : vector<8x256xf32>
    %54 = arith.addf %51, %53 : vector<8x256xf32>
    %cst_22 = arith.constant 0.000000e+00 : f32
    %cst_23 = arith.constant 1.000000e+00 : f32
    %55 = vector.broadcast %cst_22 : f32 to vector<8x256xf32>
    %56 = arith.maximumf %55, %54 : vector<8x256xf32>
    %57 = vector.broadcast %cst_23 : f32 to vector<8x256xf32>
    %58 = arith.minimumf %57, %56 : vector<8x256xf32>
    %59 = arith.select %5, %41, %58 : vector<8x256xi1>, vector<8x256xf32>
    %c0_24 = arith.constant 0 : index
    %c0_25 = arith.constant 0 : index
    %60 = vector.load %arg3[%c0_24, %c0_25] : memref<8x256xf32, #tpu.memory_space<vmem>>, vector<8x256xf32>
    tpu.vector_store %arg3[%c0_24, %c0_25], %59 {strides = array<i32>} : memref<8x256xf32, #tpu.memory_space<vmem>>, vector<8x256xf32>,
    return
  }
  func.func @transform_0(%arg0: i32) -> (i32, i32) {
    %c0_i32 = arith.constant 0 : i32
    %c0_i32_0 = arith.constant 0 : i32
    %c0_i32_1 = arith.constant 0 : i32
    return %c0_i32, %c0_i32_0 : i32, i32
  }
  func.func @transform_1(%arg0: i32) -> (i32, i32) {
    %c0_i32 = arith.constant 0 : i32
    %c0_i32_0 = arith.constant 0 : i32
    return %arg0, %c0_i32 : i32, i32
  }
  func.func @transform_2(%arg0: i32) -> (i32, i32) {
    %c0_i32 = arith.constant 0 : i32
    %c0_i32_0 = arith.constant 0 : i32
    return %arg0, %c0_i32 : i32, i32
  }
}

</mosaic_0001>

<llo_original>
// kernel: tpu_custom_call.1
$region0: #{tpu_custom_call.1}
  #allocation0 [shape = 'u32[]', space=smem, size = 0x4, offset = 0x4, fixed_abs, tag = 'smem constant byte address 0x4 - core index']
  #allocation1 [shape = 'u32[144,128]{1,0:T(1,128)}', space=vmem, size = 0x12000, scoped, tag = 'internal scratch']
  %s0 = inlined_call_operand.vmem [shape: f32[1,256], index: 0, kind: input, shape index: {}]
  %s1 = inlined_call_operand.hbm [shape: f32[8,256], index: 1, kind: input, shape index: {}, may-alias: {1,2}]
  %s2 = inlined_call_operand.hbm [shape: f32[8,256], index: 2, kind: output, shape index: {}, may-alias: {1,2}]
  %s3 = sld [smem:[#allocation0]]
  $region22: #{tpu_custom_call.1} parent=0
    _
  %s5 = ssub.s32 1, %s3
  %s6 = scalar_select 0, %s5, %s3
  $region1: #{tpu_custom_call.1} parent=0
    #allocation2 [shape = 'u8[8192]{0}', space=vmem, size = 0x2000, scoped, tag = 'input window, operand 1, single buffered']
    #allocation3 [shape = 's32[1]{0}', space=sflag, size = 0x4, scoped, tag = 'scoped memory for tpu_custom_call.1']
    #allocation4 [shape = 's32[1]{0}', space=sflag, size = 0x4, scoped, tag = 'scoped memory for tpu_custom_call.1']
    #allocation5 [shape = 'u8[8192]{0}', space=vmem, size = 0x2000, scoped, tag = 'output window, operand 0, single buffered']
    %7 = vsyncpa [#allocation3], 0
    %8 = vsyncpa [#allocation4], 0
    // Predicated region
    $region2: #{tpu_custom_call.1} parent=1 // pred_check
      _
    $region3: #{tpu_custom_call.1} parent=1 // pred_check_branch
      %10 = sbr.rel (0) target = $region5
    $region4: #{tpu_custom_call.1} parent=1 // pred_region
      _
    $region5: #{tpu_custom_call.1} parent=1 // pred_fallthru
      _
    // Predicated region
    $region6: #{tpu_custom_call.1} parent=1 // pred_check
      _
    $region7: #{tpu_custom_call.1} parent=1 // pred_check_branch
      %12 = sbr.rel (0) target = $region9
    $region8: #{tpu_custom_call.1} parent=1 // pred_region
      %s14 = ssub.s32 256, 256
      %15 = vsyncadd [#allocation3], %s14
      %s17 = sshll.u32 [#allocation2], 4
      %s18 = int_to_ptr.vmem [resolvable:$true] %s17
      %20 = dma.hbm_to_vmem [thread:$0]  %s1, 256, %s18, [#allocation3]
    $region9: #{tpu_custom_call.1} parent=1 // pred_fallthru
      _
    // Predicated region
    $region10: #{tpu_custom_call.1} parent=1 // pred_check
      _
    $region11: #{tpu_custom_call.1} parent=1 // pred_check_branch
      %22 = sbr.rel (0) target = $region13
    $region12: #{tpu_custom_call.1} parent=1 // pred_region
      %23 = dma.done [#allocation3], 256
    $region13: #{tpu_custom_call.1} parent=1 // pred_fallthru
      _
    %v24 = vld [vmem:[#allocation2] sm:$0xff]
    %v25 = vld [vmem:[#allocation2 + $0x8] sm:$0xff]
    %v26 = vld [vmem:[%s0] sm:$0x3]
    %vm27 = vcmp.gt.f32.partialorder %v26, 0.5
    %v28 = vsel %vm27, 1, 0
    %v29 = vlaneseq
    %v30 = vshrl.u32 %v29, 7
    %v31 = vsub.s32 0, %v30
    %v32 = vrot.slane %v28, %v31
    %v33 = vlaneseq
    %v34 = vshrl.u32 %v33, 7
    %v35 = vsub.s32 1, %v34
    %v36 = vrot.slane %v28, %v35
    %vm37 = vcmp.eq.s32.totalorder %v32, 1
    %vm38 = vcmp.eq.s32.totalorder %v36, 1
    %39 = vrot.lane.b32.xlu0 %v24, 1
    %v40 = vpop.permute.xlu0 %39
    %41 = vrot.lane.b32.xlu0 %v25, 1
    %v42 = vpop.permute.xlu0 %41
    %v43 = vlaneseq
    %v44 = vand.u32 %v43, 127
    %vm45 = vcmp.lt.s32.totalorder %v44, 1
    %v46 = vsel %vm45, %v40, %v42
    %v47 = vsel %vm45, %v42, %v40
    %v48 = vadd.f32 %v24, %v47
    %v49 = vadd.f32 %v25, %v46
    %50 = vrot.lane.b32.xlu0 %v24, 127
    %v51 = vpop.permute.xlu0 %50
    %52 = vrot.lane.b32.xlu0 %v25, 127
    %v53 = vpop.permute.xlu0 %52
    %vm54 = vcmp.lt.s32.totalorder %v44, 127
    %v55 = vsel %vm54, %v51, %v53
    %v56 = vsel %vm54, %v53, %v51
    %v57 = vadd.f32 %v48, %v55
    %v58 = vadd.f32 %v49, %v56
    %59 = vrot.lane.b32.xlu0 %v57, 16
    %v60 = vpop.permute.xlu0 %59
    %61 = vrot.lane.b32.xlu0 %v58, 16
    %v62 = vpop.permute.xlu0 %61
    %vm63 = vcmp.lt.s32.totalorder %v44, 16
    %v64 = vsel %vm63, %v60, %v62
    %v65 = vsel %vm63, %v62, %v60
    %v66 = vadd.f32 %v57, %v65
    %v67 = vadd.f32 %v58, %v64
    %68 = vrot.lane.b32.xlu0 %v57, 112
    %v69 = vpop.permute.xlu0 %68
    %70 = vrot.lane.b32.xlu0 %v58, 112
    %v71 = vpop.permute.xlu0 %70
    %vm72 = vcmp.lt.s32.totalorder %v44, 112
    %v73 = vsel %vm72, %v69, %v71
    %v74 = vsel %vm72, %v71, %v69
    %v75 = vadd.f32 %v66, %v73
    %v76 = vadd.f32 %v67, %v74
    %v77 = vmul.f32 %v24, 1.4846153
    %v78 = vmul.f32 %v25, 1.4846153
    %v79 = vmul.f32 %v75, -0.053846154
    %v80 = vmul.f32 %v76, -0.053846154
    %v81 = vadd.f32 %v77, %v79
    %v82 = vadd.f32 %v78, %v80
    %v83 = vmax.f32 %v81, 0.0
    %v84 = vmax.f32 %v82, 0.0
    %v85 = vmin.f32 %v83, 1.0
    %v86 = vmin.f32 %v84, 1.0
    %v87 = vsel %vm37, %v24, %v85
    %v88 = vsel %vm38, %v25, %v86
    %89 = vrot.lane.b32.xlu0 %v87, 1
    %v90 = vpop.permute.xlu0 %89
    %91 = vrot.lane.b32.xlu0 %v88, 1
    %v92 = vpop.permute.xlu0 %91
    %v93 = vsel %vm45, %v90, %v92
    %v94 = vsel %vm45, %v92, %v90
    %v95 = vadd.f32 %v87, %v94
    %v96 = vadd.f32 %v88, %v93
    %97 = vrot.lane.b32.xlu0 %v87, 127
    %v98 = vpop.permute.xlu0 %97
    %99 = vrot.lane.b32.xlu0 %v88, 127
    %v100 = vpop.permute.xlu0 %99
    %v101 = vsel %vm54, %v98, %v100
    %v102 = vsel %vm54, %v100, %v98
    %v103 = vadd.f32 %v95, %v101
    %v104 = vadd.f32 %v96, %v102
    %105 = vrot.lane.b32.xlu0 %v103, 16
    %v106 = vpop.permute.xlu0 %105
    %107 = vrot.lane.b32.xlu0 %v104, 16
    %v108 = vpop.permute.xlu0 %107
    %v109 = vsel %vm63, %v106, %v108
    %v110 = vsel %vm63, %v108, %v106
    %v111 = vadd.f32 %v103, %v110
    %v112 = vadd.f32 %v104, %v109
    %113 = vrot.lane.b32.xlu0 %v103, 112
    %v114 = vpop.permute.xlu0 %113
    %115 = vrot.lane.b32.xlu0 %v104, 112
    %v116 = vpop.permute.xlu0 %115
    %v117 = vsel %vm72, %v114, %v116
    %v118 = vsel %vm72, %v116, %v114
    %v119 = vadd.f32 %v111, %v117
    %v120 = vadd.f32 %v112, %v118
    %v121 = vmul.f32 %v87, 1.4846153
    %v122 = vmul.f32 %v88, 1.4846153
    %v123 = vmul.f32 %v119, -0.053846154
    %v124 = vmul.f32 %v120, -0.053846154
    %v125 = vadd.f32 %v121, %v123
    %v126 = vadd.f32 %v122, %v124
    %v127 = vmax.f32 %v125, 0.0
    %v128 = vmax.f32 %v126, 0.0
    %v129 = vmin.f32 %v127, 1.0
    %v130 = vmin.f32 %v128, 1.0
    %v131 = vsel %vm37, %v24, %v129
    %v132 = vsel %vm38, %v25, %v130
    %133 = vrot.lane.b32.xlu0 %v131, 1
    %v134 = vpop.permute.xlu0 %133
    %135 = vrot.lane.b32.xlu0 %v132, 1
    %v136 = vpop.permute.xlu0 %135
    %v137 = vsel %vm45, %v134, %v136
    %v138 = vsel %vm45, %v136, %v134
    %v139 = vadd.f32 %v131, %v138
    %v140 = vadd.f32 %v132, %v137
    %141 = vrot.lane.b32.xlu0 %v131, 127
    %v142 = vpop.permute.xlu0 %141
    %143 = vrot.lane.b32.xlu0 %v132, 127
    %v144 = vpop.permute.xlu0 %143
    %v145 = vsel %vm54, %v142, %v144
    %v146 = vsel %vm54, %v144, %v142
    %v147 = vadd.f32 %v139, %v145
    %v148 = vadd.f32 %v140, %v146
    %149 = vrot.lane.b32.xlu0 %v147, 16
    %v150 = vpop.permute.xlu0 %149
    %151 = vrot.lane.b32.xlu0 %v148, 16
    %v152 = vpop.permute.xlu0 %151
    %v153 = vsel %vm63, %v150, %v152
    %v154 = vsel %vm63, %v152, %v150
    %v155 = vadd.f32 %v147, %v154
    %v156 = vadd.f32 %v148, %v153
    %157 = vrot.lane.b32.xlu0 %v147, 112
    %v158 = vpop.permute.xlu0 %157
    %159 = vrot.lane.b32.xlu0 %v148, 112
    %v160 = vpop.permute.xlu0 %159
    %v161 = vsel %vm72, %v158, %v160
    %v162 = vsel %vm72, %v160, %v158
    %v163 = vadd.f32 %v155, %v161
    %v164 = vadd.f32 %v156, %v162
    %v165 = vmul.f32 %v131, 1.4846153
    %v166 = vmul.f32 %v132, 1.4846153
    %v167 = vmul.f32 %v163, -0.053846154
    %v168 = vmul.f32 %v164, -0.053846154
    %v169 = vadd.f32 %v165, %v167
    %v170 = vadd.f32 %v166, %v168
    %v171 = vmax.f32 %v169, 0.0
    %v172 = vmax.f32 %v170, 0.0
    %v173 = vmin.f32 %v171, 1.0
    %v174 = vmin.f32 %v172, 1.0
    %v175 = vsel %vm37, %v24, %v173
    %v176 = vsel %vm38, %v25, %v174
    %177 = vst [vmem:[#allocation5] sm:$0xff] %v175
    %178 = vst [vmem:[#allocation5 + $0x8] sm:$0xff] %v176
    // Predicated region
    $region14: #{tpu_custom_call.1} parent=1 // pred_check
      _
    $region15: #{tpu_custom_call.1} parent=1 // pred_check_branch
      %180 = sbr.rel (0) target = $region17
    $region16: #{tpu_custom_call.1} parent=1 // pred_region
      %s182 = ssub.s32 256, 256
      %183 = vsyncadd [#allocation4], %s182
      %s185 = sshll.u32 [#allocation5], 4
      %s186 = int_to_ptr.vmem [resolvable:$true] %s185
      %188 = dma.vmem_to_hbm [thread:$0]  %s186, 256, %s2, [#allocation4]
    $region17: #{tpu_custom_call.1} parent=1 // pred_fallthru
      _
    // Predicated region
    $region18: #{tpu_custom_call.1} parent=1 // pred_check
      _
    $region19: #{tpu_custom_call.1} parent=1 // pred_check_branch
      %190 = sbr.rel (0) target = $region21
    $region20: #{tpu_custom_call.1} parent=1 // pred_region
      %191 = dma.done [#allocation4], 256
    $region21: #{tpu_custom_call.1} parent=1 // pred_fallthru
      _
    %192 = vsyncpa [#allocation3], 1
    %193 = vsyncpa [#allocation4], 1

</llo_original>
